<compile_context>
chip_gen: v7x
topology: tpu7x:2x2x1
jax: 0.10.0
libtpu: 0.0.40
codegen_flags: <defaults>
</compile_context>

<pallas_src>
import jax
import jax.numpy as jnp
from jax.experimental import pallas as pl
from jax.experimental.pallas import tpu as pltpu

EPS = 1e-5  # PyTorch BatchNorm1d default eps


def mlp_classifier_kernel(x_ref, w1_ref, w2_ref, w3_ref, wc_ref, vecs_ref, o_ref):
    x = x_ref[...].astype(jnp.float32)
    vecs = vecs_ref[...]  # (9, Dmax): rows = [b1,g1,be1, b2,g2,be2, b3,g3,be3]

    def layer(h, w_ref, row0):
        d = w_ref.shape[1]
        b = vecs[row0 + 0:row0 + 1, :d]
        g = vecs[row0 + 1:row0 + 2, :d]
        be = vecs[row0 + 2:row0 + 3, :d]

        # Linear + ReLU
        z = jnp.dot(h, w_ref[...], preferred_element_type=jnp.float32) + b
        z = jnp.maximum(z, 0.0)

        # BatchNorm1d, training mode: biased batch variance (matches PyTorch normalization).
        mean = jnp.mean(z, axis=0, keepdims=True)
        var = jnp.mean((z - mean) ** 2, axis=0, keepdims=True)

        # Affine folded into scale/shift -> one mul + one add per element.
        scale = g * jax.lax.rsqrt(var + EPS)
        shift = be - mean * scale
        # Dropout(p=0) is the identity -> omitted.
        return z * scale + shift

    h = layer(x, w1_ref, 0)
    h = layer(h, w2_ref, 3)
    h = layer(h, w3_ref, 6)

    # classify: Linear with no bias
    logits = jnp.dot(h, wc_ref[...], preferred_element_type=jnp.float32)

    # softmax along dim=1 (class axis), max-stabilized, exact reciprocal (1e-5 tolerance)
    m = jnp.max(logits, axis=1, keepdims=True)
    e = jnp.exp(logits - m)
    o_ref[...] = (e * pl.reciprocal(jnp.sum(e, axis=1, keepdims=True), approx=False)).astype(
        o_ref.dtype
    )


def prepare_params(params):
    """One-time packing: transpose Linear weights (out,in)->(in,out) and stack the nine
    1-D BN/bias params into a single (9, Dmax) slab.  Do this OUTSIDE the hot path."""
    h1 = params["w1"].shape[0]
    h2 = params["w2"].shape[0]
    h3 = params["w3"].shape[0]
    dmax = max(h1, h2, h3)

    def pad_row(v):
        v = v.astype(jnp.float32)
        return jnp.pad(v, (0, dmax - v.shape[0]))

    vecs = jnp.stack(
        [
            pad_row(params["b1"]), pad_row(params["g1"]), pad_row(params["be1"]),
            pad_row(params["b2"]), pad_row(params["g2"]), pad_row(params["be2"]),
            pad_row(params["b3"]), pad_row(params["g3"]), pad_row(params["be3"]),
        ],
        axis=0,
    )  # (9, Dmax)

    return dict(
        w1=params["w1"].T.astype(jnp.float32),
        w2=params["w2"].T.astype(jnp.float32),
        w3=params["w3"].T.astype(jnp.float32),
        wc=params["wc"].T.astype(jnp.float32),
        vecs=vecs,
    )


@jax.jit
def mlp_classifier_forward(x, packed):
    """x: (B, in_dim) float32.  packed: output of prepare_params()."""
    B = x.shape[0]
    n_class = packed["wc"].shape[1]

    args = (
        x.astype(jnp.float32),
        packed["w1"], packed["w2"], packed["w3"], packed["wc"],
        packed["vecs"],
    )

    # Small problem, BN needs the whole batch resident -> single grid point, everything in VMEM.
    in_specs = [pl.BlockSpec(memory_space=pltpu.VMEM) for _ in args]
    out_spec = pl.BlockSpec(memory_space=pltpu.VMEM)

    return pl.pallas_call(
        mlp_classifier_kernel,
        out_shape=jax.ShapeDtypeStruct((B, n_class), jnp.float32),
        in_specs=in_specs,
        out_specs=out_spec,
    )(*args)


def make_params(key, in_dim, h1, h2, h3, n_class):
    """Deterministic synthetic parameter init (uniform, PyTorch-Linear-like bounds).
    Gamma/beta are randomized (not 1/0) so the folded BN affine path is actually exercised."""
    ks = jax.random.split(key, 10)

    def lin(k, fan_in, fan_out):
        bound = 1.0 / jnp.sqrt(fan_in)
        kw, kb = jax.random.split(k)
        w = jax.random.uniform(kw, (fan_out, fan_in), jnp.float32, -bound, bound)
        b = jax.random.uniform(kb, (fan_out,), jnp.float32, -bound, bound)
        return w, b

    def bn(k, d):
        kg, kb = jax.random.split(k)
        g = jax.random.uniform(kg, (d,), jnp.float32, 0.5, 1.5)
        be = jax.random.uniform(kb, (d,), jnp.float32, -0.5, 0.5)
        return g, be

    w1, b1 = lin(ks[0], in_dim, h1)
    w2, b2 = lin(ks[1], h1, h2)
    w3, b3 = lin(ks[2], h2, h3)
    wc = jax.random.uniform(ks[3], (n_class, h3), jnp.float32,
                            -1.0 / jnp.sqrt(h3), 1.0 / jnp.sqrt(h3))
    g1, be1 = bn(ks[4], h1)
    g2, be2 = bn(ks[5], h2)
    g3, be3 = bn(ks[6], h3)
    return dict(
        w1=w1, b1=b1, g1=g1, be1=be1,
        w2=w2, b2=b2, g2=g2, be2=be2,
        w3=w3, b3=b3, g3=g3, be3=be3,
        wc=wc,
    )


def reference_forward(x, p):
    """Pure-JAX reference matching the PyTorch forward (training-mode BN, dropout p=0)."""
    def layer(h, w, b, g, be):
        z = jnp.maximum(h @ w.T + b, 0.0)
        mean = jnp.mean(z, axis=0, keepdims=True)
        var = jnp.mean((z - mean) ** 2, axis=0, keepdims=True)
        return (z - mean) / jnp.sqrt(var + EPS) * g + be

    h = layer(x, p["w1"], p["b1"], p["g1"], p["be1"])
    h = layer(h, p["w2"], p["b2"], p["g2"], p["be2"])
    h = layer(h, p["w3"], p["b3"], p["g3"], p["be3"])
    logits = h @ p["wc"].T
    return jax.nn.softmax(logits, axis=1)


if __name__ == "__main__":
    key = jax.random.PRNGKey(0)
    k_x, k_p = jax.random.split(key)

    B, in_dim = 8, 32
    h1 = h2 = h3 = 32
    n_class = 8

    x = jax.random.normal(k_x, (B, in_dim), jnp.float32)
    params = make_params(k_p, in_dim, h1, h2, h3, n_class)

    packed = prepare_params(params)          # one-time packing / transposes (not in hot path)
    out = mlp_classifier_forward(x, packed)  # jitted pallas_call, 6 operands
    out = jax.block_until_ready(out)

    ref = reference_forward(x, params)
    assert out.shape == (B, n_class)
    assert jnp.allclose(out, ref, atol=1e-5, rtol=1e-5), "mismatch vs reference"
    assert jnp.allclose(jnp.sum(out, axis=1), 1.0, atol=1e-5), "softmax rows must sum to 1"

    print("KERNEL_OK")
</pallas_src>

<mosaic_0001>
module attributes {stable_mosaic.version = 11 : i64} {
  func.func @mlp_classifier_kernel(%arg0: memref<8x32xf32, #tpu.memory_space<vmem>>, %arg1: memref<32x32xf32, #tpu.memory_space<vmem>>, %arg2: memref<32x32xf32, #tpu.memory_space<vmem>>, %arg3: memref<32x32xf32, #tpu.memory_space<vmem>>, %arg4: memref<32x8xf32, #tpu.memory_space<vmem>>, %arg5: memref<9x32xf32, #tpu.memory_space<vmem>>, %arg6: memref<8x8xf32, #tpu.memory_space<vmem>>) attributes {dimension_semantics = [], scalar_prefetch = 0 : i64, scratch_operands = 0 : i64, tpu.core_type = #tpu.core_type<tc>} {
    %c0 = arith.constant 0 : index
    %c0_0 = arith.constant 0 : index
    %0 = vector.load %arg0[%c0, %c0_0] : memref<8x32xf32, #tpu.memory_space<vmem>>, vector<8x32xf32>
    %c0_1 = arith.constant 0 : index
    %c0_2 = arith.constant 0 : index
    %1 = vector.load %arg5[%c0_1, %c0_2] : memref<9x32xf32, #tpu.memory_space<vmem>>, vector<9x32xf32>
    %2 = vector.extract_strided_slice %1 {offsets = [0, 0], sizes = [1, 32], strides = [1, 1]} : vector<9x32xf32> to vector<1x32xf32>
    %3 = vector.extract_strided_slice %1 {offsets = [1, 0], sizes = [1, 32], strides = [1, 1]} : vector<9x32xf32> to vector<1x32xf32>
    %4 = vector.extract_strided_slice %1 {offsets = [2, 0], sizes = [1, 32], strides = [1, 1]} : vector<9x32xf32> to vector<1x32xf32>
    %c0_3 = arith.constant 0 : index
    %c0_4 = arith.constant 0 : index
    %5 = vector.load %arg1[%c0_3, %c0_4] : memref<32x32xf32, #tpu.memory_space<vmem>>, vector<32x32xf32>
    %cst = arith.constant dense<0.000000e+00> : vector<8x32xf32>
    %6 = tpu.matmul %0, %5, %cst {dimension_numbers = #tpu.dot_dimension_numbers<[1], [0], [0], [1], [0, 0, 1, 1], [], []>} : vector<8x32xf32>, vector<32x32xf32>, vector<8x32xf32> -> vector<8x32xf32>
    %7 = vector.broadcast %2 : vector<1x32xf32> to vector<8x32xf32>
    %8 = arith.addf %6, %7 : vector<8x32xf32>
    %cst_5 = arith.constant 0.000000e+00 : f32
    %9 = vector.broadcast %cst_5 : f32 to vector<8x32xf32>
    %10 = arith.maximumf %8, %9 : vector<8x32xf32>
    %cst_6 = arith.constant dense<0.000000e+00> : vector<32xf32>
    %11 = vector.multi_reduction <add>, %10, %cst_6 [0] : vector<8x32xf32> to vector<32xf32>
    %12 = vector.shape_cast %11 : vector<32xf32> to vector<1x32xf32>
    %cst_7 = arith.constant 8.000000e+00 : f32
    %13 = vector.broadcast %cst_7 : f32 to vector<1x32xf32>
    %14 = arith.divf %12, %13 : vector<1x32xf32>
    %15 = vector.broadcast %14 : vector<1x32xf32> to vector<8x32xf32>
    %16 = arith.subf %10, %15 : vector<8x32xf32>
    %17 = arith.mulf %16, %16 : vector<8x32xf32>
    %cst_8 = arith.constant dense<0.000000e+00> : vector<32xf32>
    %18 = vector.multi_reduction <add>, %17, %cst_8 [0] : vector<8x32xf32> to vector<32xf32>
    %19 = vector.shape_cast %18 : vector<32xf32> to vector<1x32xf32>
    %cst_9 = arith.constant 8.000000e+00 : f32
    %20 = vector.broadcast %cst_9 : f32 to vector<1x32xf32>
    %21 = arith.divf %19, %20 : vector<1x32xf32>
    %cst_10 = arith.constant 9.99999974E-6 : f32
    %22 = vector.broadcast %cst_10 : f32 to vector<1x32xf32>
    %23 = arith.addf %21, %22 : vector<1x32xf32>
    %24 = math.rsqrt %23 : vector<1x32xf32>
    %25 = arith.mulf %3, %24 : vector<1x32xf32>
    %26 = arith.mulf %14, %25 : vector<1x32xf32>
    %27 = arith.subf %4, %26 : vector<1x32xf32>
    %28 = vector.broadcast %25 : vector<1x32xf32> to vector<8x32xf32>
    %29 = arith.mulf %10, %28 : vector<8x32xf32>
    %30 = vector.broadcast %27 : vector<1x32xf32> to vector<8x32xf32>
    %31 = arith.addf %29, %30 : vector<8x32xf32>
    %32 = vector.extract_strided_slice %1 {offsets = [3, 0], sizes = [1, 32], strides = [1, 1]} : vector<9x32xf32> to vector<1x32xf32>
    %33 = vector.extract_strided_slice %1 {offsets = [4, 0], sizes = [1, 32], strides = [1, 1]} : vector<9x32xf32> to vector<1x32xf32>
    %34 = vector.extract_strided_slice %1 {offsets = [5, 0], sizes = [1, 32], strides = [1, 1]} : vector<9x32xf32> to vector<1x32xf32>
    %c0_11 = arith.constant 0 : index
    %c0_12 = arith.constant 0 : index
    %35 = vector.load %arg2[%c0_11, %c0_12] : memref<32x32xf32, #tpu.memory_space<vmem>>, vector<32x32xf32>
    %cst_13 = arith.constant dense<0.000000e+00> : vector<8x32xf32>
    %36 = tpu.matmul %31, %35, %cst_13 {dimension_numbers = #tpu.dot_dimension_numbers<[1], [0], [0], [1], [0, 0, 1, 1], [], []>} : vector<8x32xf32>, vector<32x32xf32>, vector<8x32xf32> -> vector<8x32xf32>
    %37 = vector.broadcast %32 : vector<1x32xf32> to vector<8x32xf32>
    %38 = arith.addf %36, %37 : vector<8x32xf32>
    %cst_14 = arith.constant 0.000000e+00 : f32
    %39 = vector.broadcast %cst_14 : f32 to vector<8x32xf32>
    %40 = arith.maximumf %38, %39 : vector<8x32xf32>
    %cst_15 = arith.constant dense<0.000000e+00> : vector<32xf32>
    %41 = vector.multi_reduction <add>, %40, %cst_15 [0] : vector<8x32xf32> to vector<32xf32>
    %42 = vector.shape_cast %41 : vector<32xf32> to vector<1x32xf32>
    %cst_16 = arith.constant 8.000000e+00 : f32
    %43 = vector.broadcast %cst_16 : f32 to vector<1x32xf32>
    %44 = arith.divf %42, %43 : vector<1x32xf32>
    %45 = vector.broadcast %44 : vector<1x32xf32> to vector<8x32xf32>
    %46 = arith.subf %40, %45 : vector<8x32xf32>
    %47 = arith.mulf %46, %46 : vector<8x32xf32>
    %cst_17 = arith.constant dense<0.000000e+00> : vector<32xf32>
    %48 = vector.multi_reduction <add>, %47, %cst_17 [0] : vector<8x32xf32> to vector<32xf32>
    %49 = vector.shape_cast %48 : vector<32xf32> to vector<1x32xf32>
    %cst_18 = arith.constant 8.000000e+00 : f32
    %50 = vector.broadcast %cst_18 : f32 to vector<1x32xf32>
    %51 = arith.divf %49, %50 : vector<1x32xf32>
    %cst_19 = arith.constant 9.99999974E-6 : f32
    %52 = vector.broadcast %cst_19 : f32 to vector<1x32xf32>
    %53 = arith.addf %51, %52 : vector<1x32xf32>
    %54 = math.rsqrt %53 : vector<1x32xf32>
    %55 = arith.mulf %33, %54 : vector<1x32xf32>
    %56 = arith.mulf %44, %55 : vector<1x32xf32>
    %57 = arith.subf %34, %56 : vector<1x32xf32>
    %58 = vector.broadcast %55 : vector<1x32xf32> to vector<8x32xf32>
    %59 = arith.mulf %40, %58 : vector<8x32xf32>
    %60 = vector.broadcast %57 : vector<1x32xf32> to vector<8x32xf32>
    %61 = arith.addf %59, %60 : vector<8x32xf32>
    %62 = vector.extract_strided_slice %1 {offsets = [6, 0], sizes = [1, 32], strides = [1, 1]} : vector<9x32xf32> to vector<1x32xf32>
    %63 = vector.extract_strided_slice %1 {offsets = [7, 0], sizes = [1, 32], strides = [1, 1]} : vector<9x32xf32> to vector<1x32xf32>
    %64 = vector.extract_strided_slice %1 {offsets = [8, 0], sizes = [1, 32], strides = [1, 1]} : vector<9x32xf32> to vector<1x32xf32>
    %c0_20 = arith.constant 0 : index
    %c0_21 = arith.constant 0 : index
    %65 = vector.load %arg3[%c0_20, %c0_21] : memref<32x32xf32, #tpu.memory_space<vmem>>, vector<32x32xf32>
    %cst_22 = arith.constant dense<0.000000e+00> : vector<8x32xf32>
    %66 = tpu.matmul %61, %65, %cst_22 {dimension_numbers = #tpu.dot_dimension_numbers<[1], [0], [0], [1], [0, 0, 1, 1], [], []>} : vector<8x32xf32>, vector<32x32xf32>, vector<8x32xf32> -> vector<8x32xf32>
    %67 = vector.broadcast %62 : vector<1x32xf32> to vector<8x32xf32>
    %68 = arith.addf %66, %67 : vector<8x32xf32>
    %cst_23 = arith.constant 0.000000e+00 : f32
    %69 = vector.broadcast %cst_23 : f32 to vector<8x32xf32>
    %70 = arith.maximumf %68, %69 : vector<8x32xf32>
    %cst_24 = arith.constant dense<0.000000e+00> : vector<32xf32>
    %71 = vector.multi_reduction <add>, %70, %cst_24 [0] : vector<8x32xf32> to vector<32xf32>
    %72 = vector.shape_cast %71 : vector<32xf32> to vector<1x32xf32>
    %cst_25 = arith.constant 8.000000e+00 : f32
    %73 = vector.broadcast %cst_25 : f32 to vector<1x32xf32>
    %74 = arith.divf %72, %73 : vector<1x32xf32>
    %75 = vector.broadcast %74 : vector<1x32xf32> to vector<8x32xf32>
    %76 = arith.subf %70, %75 : vector<8x32xf32>
    %77 = arith.mulf %76, %76 : vector<8x32xf32>
    %cst_26 = arith.constant dense<0.000000e+00> : vector<32xf32>
    %78 = vector.multi_reduction <add>, %77, %cst_26 [0] : vector<8x32xf32> to vector<32xf32>
    %79 = vector.shape_cast %78 : vector<32xf32> to vector<1x32xf32>
    %cst_27 = arith.constant 8.000000e+00 : f32
    %80 = vector.broadcast %cst_27 : f32 to vector<1x32xf32>
    %81 = arith.divf %79, %80 : vector<1x32xf32>
    %cst_28 = arith.constant 9.99999974E-6 : f32
    %82 = vector.broadcast %cst_28 : f32 to vector<1x32xf32>
    %83 = arith.addf %81, %82 : vector<1x32xf32>
    %84 = math.rsqrt %83 : vector<1x32xf32>
    %85 = arith.mulf %63, %84 : vector<1x32xf32>
    %86 = arith.mulf %74, %85 : vector<1x32xf32>
    %87 = arith.subf %64, %86 : vector<1x32xf32>
    %88 = vector.broadcast %85 : vector<1x32xf32> to vector<8x32xf32>
    %89 = arith.mulf %70, %88 : vector<8x32xf32>
    %90 = vector.broadcast %87 : vector<1x32xf32> to vector<8x32xf32>
    %91 = arith.addf %89, %90 : vector<8x32xf32>
    %c0_29 = arith.constant 0 : index
    %c0_30 = arith.constant 0 : index
    %92 = vector.load %arg4[%c0_29, %c0_30] : memref<32x8xf32, #tpu.memory_space<vmem>>, vector<32x8xf32>
    %cst_31 = arith.constant dense<0.000000e+00> : vector<8x8xf32>
    %93 = tpu.matmul %91, %92, %cst_31 {dimension_numbers = #tpu.dot_dimension_numbers<[1], [0], [0], [1], [0, 0, 1, 1], [], []>} : vector<8x32xf32>, vector<32x8xf32>, vector<8x8xf32> -> vector<8x8xf32>
    %cst_32 = arith.constant dense<0xFF800000> : vector<8xf32>
    %94 = vector.multi_reduction <maximumf>, %93, %cst_32 [1] : vector<8x8xf32> to vector<8xf32>
    %95 = vector.shape_cast %94 : vector<8xf32> to vector<8x1xf32>
    %96 = vector.broadcast %95 : vector<8x1xf32> to vector<8x8xf32>
    %97 = arith.subf %93, %96 : vector<8x8xf32>
    %98 = math.exp %97 : vector<8x8xf32>
    %cst_33 = arith.constant dense<0.000000e+00> : vector<8xf32>
    %99 = vector.multi_reduction <add>, %98, %cst_33 [1] : vector<8x8xf32> to vector<8xf32>
    %100 = vector.shape_cast %99 : vector<8xf32> to vector<8x1xf32>
    %101 = tpu.reciprocal %100 : vector<8x1xf32> -> vector<8x1xf32>
    %102 = vector.broadcast %101 : vector<8x1xf32> to vector<8x8xf32>
    %103 = arith.mulf %98, %102 : vector<8x8xf32>
    %c0_34 = arith.constant 0 : index
    %c0_35 = arith.constant 0 : index
    %104 = vector.load %arg6[%c0_34, %c0_35] : memref<8x8xf32, #tpu.memory_space<vmem>>, vector<8x8xf32>
    tpu.vector_store %arg6[%c0_34, %c0_35], %103 {strides = array<i32>} : memref<8x8xf32, #tpu.memory_space<vmem>>, vector<8x8xf32>,
    return
  }
}

</mosaic_0001>

<llo_original>
// kernel: mlp_classifier_forward.1
$region0: #{mlp_classifier_forward.1}
  #allocation0 [shape = 'u32[]', space=smem, size = 0x4, offset = 0x4, fixed_abs, tag = 'smem constant byte address 0x4 - core index']
  #allocation1 [shape = 'u32[144,128]{1,0:T(1,128)}', space=vmem, size = 0x12000, scoped, tag = 'internal scratch']
  %s0 = inlined_call_operand.vmem [shape: f32[8,32], index: 0, kind: input, shape index: {}]
  %s1 = inlined_call_operand.vmem [shape: f32[32,32], index: 1, kind: input, shape index: {}]
  %s2 = inlined_call_operand.hbm [shape: f32[32,32], index: 2, kind: input, shape index: {}]
  %s3 = inlined_call_operand.hbm [shape: f32[32,32], index: 3, kind: input, shape index: {}]
  %s4 = inlined_call_operand.vmem [shape: f32[32,8], index: 4, kind: input, shape index: {}]
  %s5 = inlined_call_operand.hbm [shape: f32[9,32], index: 5, kind: input, shape index: {}]
  %s6 = inlined_call_operand.hbm [shape: f32[8,8], index: 6, kind: output, shape index: {}]
  %s7 = sld [smem:[#allocation0]]
  $region46: #{mlp_classifier_forward.1} parent=0
    _
  %s9 = ssub.s32 1, %s7
  %s10 = scalar_select 0, %s9, %s7
  $region1: #{mlp_classifier_forward.1} parent=0
    #allocation2 [shape = 'u8[16384]{0}', space=vmem, size = 0x4000, scoped, tag = 'input window, operand 2, single buffered']
    #allocation3 [shape = 's32[1]{0}', space=sflag, size = 0x4, scoped, tag = 'scoped memory for mlp_classifier_forward.1']
    #allocation4 [shape = 's32[1]{0}', space=sflag, size = 0x4, scoped, tag = 'scoped memory for mlp_classifier_forward.1']
    #allocation5 [shape = 'u8[16384]{0}', space=vmem, size = 0x4000, scoped, tag = 'input window, operand 3, single buffered']
    #allocation6 [shape = 's32[1]{0}', space=sflag, size = 0x4, scoped, tag = 'scoped memory for mlp_classifier_forward.1']
    #allocation7 [shape = 'u8[8192]{0}', space=vmem, size = 0x2000, scoped, tag = 'input window, operand 5, single buffered']
    #allocation8 [shape = 'u8[4096]{0}', space=vmem, size = 0x1000, scoped, tag = 'output window, operand 0, single buffered']
    %11 = vsyncpa [#allocation3], 0
    %12 = vsyncpa [#allocation6], 0
    %13 = vsyncpa [#allocation4], 0
    // Predicated region
    $region2: #{mlp_classifier_forward.1} parent=1 // pred_check
      _
    $region3: #{mlp_classifier_forward.1} parent=1 // pred_check_branch
      %15 = sbr.rel (0) target = $region5
    $region4: #{mlp_classifier_forward.1} parent=1 // pred_region
      _
    $region5: #{mlp_classifier_forward.1} parent=1 // pred_fallthru
      _
    // Predicated region
    $region6: #{mlp_classifier_forward.1} parent=1 // pred_check
      _
    $region7: #{mlp_classifier_forward.1} parent=1 // pred_check_branch
      %17 = sbr.rel (0) target = $region9
    $region8: #{mlp_classifier_forward.1} parent=1 // pred_region
      _
    $region9: #{mlp_classifier_forward.1} parent=1 // pred_fallthru
      _
    // Predicated region
    $region10: #{mlp_classifier_forward.1} parent=1 // pred_check
      _
    $region11: #{mlp_classifier_forward.1} parent=1 // pred_check_branch
      %19 = sbr.rel (0) target = $region13
    $region12: #{mlp_classifier_forward.1} parent=1 // pred_region
      %s21 = ssub.s32 512, 512
      %22 = vsyncadd [#allocation3], %s21
      %s23 = sshll.u32 [#allocation2], 4
      %s24 = int_to_ptr.vmem [resolvable:$true] %s23
      %29 = dma.hbm_to_vmem [thread:$0]  %s2, 512, %s24, [#allocation3], 128, 128, 8
    $region13: #{mlp_classifier_forward.1} parent=1 // pred_fallthru
      _
    // Predicated region
    $region14: #{mlp_classifier_forward.1} parent=1 // pred_check
      _
    $region15: #{mlp_classifier_forward.1} parent=1 // pred_check_branch
      %31 = sbr.rel (0) target = $region17
    $region16: #{mlp_classifier_forward.1} parent=1 // pred_region
      %s33 = ssub.s32 512, 512
      %34 = vsyncadd [#allocation6], %s33
      %s35 = sshll.u32 [#allocation5], 4
      %s36 = int_to_ptr.vmem [resolvable:$true] %s35
      %41 = dma.hbm_to_vmem [thread:$0]  %s3, 512, %s36, [#allocation6], 128, 128, 8
    $region17: #{mlp_classifier_forward.1} parent=1 // pred_fallthru
      _
    // Predicated region
    $region18: #{mlp_classifier_forward.1} parent=1 // pred_check
      _
    $region19: #{mlp_classifier_forward.1} parent=1 // pred_check_branch
      %43 = sbr.rel (0) target = $region21
    $region20: #{mlp_classifier_forward.1} parent=1 // pred_region
      _
    $region21: #{mlp_classifier_forward.1} parent=1 // pred_fallthru
      _
    // Predicated region
    $region22: #{mlp_classifier_forward.1} parent=1 // pred_check
      _
    $region23: #{mlp_classifier_forward.1} parent=1 // pred_check_branch
      %45 = sbr.rel (0) target = $region25
    $region24: #{mlp_classifier_forward.1} parent=1 // pred_region
      %s47 = ssub.s32 256, 256
      %48 = vsyncadd [#allocation6], %s47
      %s49 = sshll.u32 [#allocation7], 4
      %s50 = int_to_ptr.vmem [resolvable:$true] %s49
      %55 = dma.hbm_to_vmem [thread:$0]  %s5, 256, %s50, [#allocation6], 128, 128, 8
    $region25: #{mlp_classifier_forward.1} parent=1 // pred_fallthru
      _
    // Predicated region
    $region26: #{mlp_classifier_forward.1} parent=1 // pred_check
      _
    $region27: #{mlp_classifier_forward.1} parent=1 // pred_check_branch
      %57 = sbr.rel (0) target = $region29
    $region28: #{mlp_classifier_forward.1} parent=1 // pred_region
      %58 = dma.done [#allocation3], 512
    $region29: #{mlp_classifier_forward.1} parent=1 // pred_fallthru
      _
    // Predicated region
    $region30: #{mlp_classifier_forward.1} parent=1 // pred_check
      _
    $region31: #{mlp_classifier_forward.1} parent=1 // pred_check_branch
      %60 = sbr.rel (0) target = $region33
    $region32: #{mlp_classifier_forward.1} parent=1 // pred_region
      %61 = dma.done [#allocation6], 512
    $region33: #{mlp_classifier_forward.1} parent=1 // pred_fallthru
      _
    // Predicated region
    $region34: #{mlp_classifier_forward.1} parent=1 // pred_check
      _
    $region35: #{mlp_classifier_forward.1} parent=1 // pred_check_branch
      %63 = sbr.rel (0) target = $region37
    $region36: #{mlp_classifier_forward.1} parent=1 // pred_region
      %64 = dma.done [#allocation6], 256
    $region37: #{mlp_classifier_forward.1} parent=1 // pred_fallthru
      _
    %v65 = vld [vmem:[%s0] sm:$0xff]
    %v66 = vld [vmem:[#allocation7] sm:$0xff]
    %v67 = vld [vmem:[#allocation7 + $0x8] sm:$0x1]
    %v68 = vld [vmem:[%s1] sm:$0xff]
    %v69 = vld [vmem:[%s1 + $0x8] sm:$0xff]
    %v70 = vld [vmem:[%s1 + $0x10] sm:$0xff]
    %v71 = vld [vmem:[%s1 + $0x18] sm:$0xff]
    %v72 = vlaneseq
    %v73 = vshrl.u32 %v72, 7
    %v74 = vsub.s32 0, %v73
    %v75 = vrot.slane %v66, %v74
    %vm76 = vcmask 261120
    %v78 = vsel %vm76, %v65, 0
    %80 = vmatprep.subr.mxu0 0.0
    %81 = vmatpush1.msra.mxu0 %v68
    %82 = vmatprep.subr.mxu0 0.0
    %83 = vmatpush1.msra.mxu0 %v69
    %84 = vmatprep.subr.mxu0 0.0
    %85 = vmatpush1.msra.mxu0 %v70
    %86 = vmatprep.subr.mxu0 0.0
    %87 = vmatpush1.msra.mxu0 %v71
    %88 = vmatprep.subr.mxu0 0.0
    %89 = vmatpush1.msra.mxu0 0.0
    %90 = vmatprep.subr.mxu0 0.0
    %91 = vmatpush1.msra.mxu0 0.0
    %92 = vmatprep.subr.mxu0 0.0
    %93 = vmatpush1.msra.mxu0 0.0
    %94 = vmatprep.subr.mxu0 0.0
    %95 = vmatpush1.msra.mxu0 0.0
    %96 = vmatprep.subr.mxu0 0.0
    %97 = vmatpush1.msra.mxu0 0.0
    %98 = vmatprep.subr.mxu0 0.0
    %99 = vmatpush1.msra.mxu0 0.0
    %100 = vmatprep.subr.mxu0 0.0
    %101 = vmatpush1.msra.mxu0 0.0
    %102 = vmatprep.subr.mxu0 0.0
    %103 = vmatpush1.msra.mxu0 0.0
    %104 = vmatprep.subr.mxu0 0.0
    %105 = vmatpush1.msra.mxu0 0.0
    %106 = vmatprep.subr.mxu0 0.0
    %107 = vmatpush1.msra.mxu0 0.0
    %108 = vmatprep.subr.mxu0 0.0
    %109 = vmatpush1.msra.mxu0 0.0
    %110 = vmatprep.subr.mxu0 0.0
    %111 = vmatpush1.msra.mxu0 0.0
    %112 = vmatprep.subr.mxu0 0.0
    %113 = vmatpush1.msra.mxu0 0.0
    %114 = vmatprep.subr.mxu0 0.0
    %115 = vmatpush1.msra.mxu0 0.0
    %116 = vmatprep.subr.mxu0 0.0
    %117 = vmatpush1.msra.mxu0 0.0
    %118 = vmatprep.subr.mxu0 0.0
    %119 = vmatpush1.msra.mxu0 0.0
    %120 = vmatprep.subr.mxu0 0.0
    %121 = vmatpush1.msra.mxu0 0.0
    %122 = vmatprep.subr.mxu0 0.0
    %123 = vmatpush1.msra.mxu0 0.0
    %124 = vmatprep.subr.mxu0 0.0
    %125 = vmatpush1.msra.mxu0 0.0
    %126 = vmatprep.subr.mxu0 0.0
    %127 = vmatpush1.msra.mxu0 0.0
    %128 = vmatprep.subr.mxu0 0.0
    %129 = vmatpush1.msra.mxu0 0.0
    %130 = vmatprep.subr.mxu0 0.0
    %131 = vmatpush1.msra.mxu0 0.0
    %132 = vmatprep.subr.mxu0 0.0
    %133 = vmatpush1.msra.mxu0 0.0
    %134 = vmatprep.subr.mxu0 0.0
    %135 = vmatpush1.msra.mxu0 0.0
    %136 = vmatprep.subr.mxu0 0.0
    %137 = vmatpush1.msra.mxu0 0.0
    %138 = vmatprep.subr.mxu0 0.0
    %139 = vmatpush1.msra.mxu0 0.0
    %140 = vmatprep.subr.mxu0 0.0
    %141 = vmatpush1.msra.mxu0 0.0
    %142 = vmatprep.subr.mxu0 0.0
    %143 = vmatpush1.msra.mxu0 0.0
    %144 = vmatprep.mubr.f32.mxu0 0.0
    %145 = vmatmul.mubr.f32.gmra.mrb[0].mxu0 %v78
    %v146 = vpop.f32.mrb[0].mxu0
    %v147 = vadd.f32 %v75, %v146
    %v148 = vpop.f32.mrb[0].mxu0
    %149 = vdwg.mxu0
    %v150 = vmax.f32 %v147, 0.0
    %v151 = vsel %vm76, %v150, 0.0
    %v152 = vrot.slane %v151, 4
    %v153 = vadd.f32 %v151, %v152
    %v154 = vrot.slane %v153, 2
    %v155 = vadd.f32 %v153, %v154
    %v156 = vrot.slane %v155, 1
    %v157 = vadd.f32 %v155, %v156
    %v158 = vrcp.pop 8.0
    %v159 = vmul.f32 %v157, %v158
    %v160 = vsub.f32 %v150, %v159
    %v161 = vmul.f32 %v160, %v160
    %v162 = vsel %vm76, %v161, 0.0
    %v163 = vrot.slane %v162, 4
    %v164 = vadd.f32 %v162, %v163
    %v165 = vrot.slane %v164, 2
    %v166 = vadd.f32 %v164, %v165
    %v167 = vrot.slane %v166, 1
    %v168 = vadd.f32 %v166, %v167
    %v169 = vmul.f32 %v168, %v158
    %v170 = vadd.f32 %v169, 1e-05
    %v171 = vrsqrt.pop %v170
    %v172 = vmul.f32 %v66, %v171
    %v173 = vmul.f32 %v159, %v172
    %v175 = vrot.slane %v173, 7
    %v177 = vsub.f32 %v66, %v175
    %v178 = vlaneseq
    %v179 = vshrl.u32 %v178, 7
    %v180 = vsub.s32 1, %v179
    %v181 = vrot.slane %v172, %v180
    %v182 = vmul.f32 %v150, %v181
    %v183 = vlaneseq
    %v184 = vshrl.u32 %v183, 7
    %v185 = vsub.s32 2, %v184
    %v186 = vrot.slane %v177, %v185
    %v187 = vadd.f32 %v182, %v186
    %v188 = vld [vmem:[#allocation2] sm:$0xff]
    %v189 = vld [vmem:[#allocation2 + $0x8] sm:$0xff]
    %v190 = vld [vmem:[#allocation2 + $0x10] sm:$0xff]
    %v191 = vld [vmem:[#allocation2 + $0x18] sm:$0xff]
    %v192 = vlaneseq
    %v193 = vshrl.u32 %v192, 7
    %v194 = vsub.s32 3, %v193
    %v195 = vrot.slane %v66, %v194
    %v197 = vsel %vm76, %v187, 0
    %199 = vmatprep.subr.mxu0 0.0
    %200 = vmatpush1.msra.mxu0 %v188
    %201 = vmatprep.subr.mxu0 0.0
    %202 = vmatpush1.msra.mxu0 %v189
    %203 = vmatprep.subr.mxu0 0.0
    %204 = vmatpush1.msra.mxu0 %v190
    %205 = vmatprep.subr.mxu0 0.0
    %206 = vmatpush1.msra.mxu0 %v191
    %207 = vmatprep.subr.mxu0 0.0
    %208 = vmatpush1.msra.mxu0 0.0
    %209 = vmatprep.subr.mxu0 0.0
    %210 = vmatpush1.msra.mxu0 0.0
    %211 = vmatprep.subr.mxu0 0.0
    %212 = vmatpush1.msra.mxu0 0.0
    %213 = vmatprep.subr.mxu0 0.0
    %214 = vmatpush1.msra.mxu0 0.0
    %215 = vmatprep.subr.mxu0 0.0
    %216 = vmatpush1.msra.mxu0 0.0
    %217 = vmatprep.subr.mxu0 0.0
    %218 = vmatpush1.msra.mxu0 0.0
    %219 = vmatprep.subr.mxu0 0.0
    %220 = vmatpush1.msra.mxu0 0.0
    %221 = vmatprep.subr.mxu0 0.0
    %222 = vmatpush1.msra.mxu0 0.0
    %223 = vmatprep.subr.mxu0 0.0
    %224 = vmatpush1.msra.mxu0 0.0
    %225 = vmatprep.subr.mxu0 0.0
    %226 = vmatpush1.msra.mxu0 0.0
    %227 = vmatprep.subr.mxu0 0.0
    %228 = vmatpush1.msra.mxu0 0.0
    %229 = vmatprep.subr.mxu0 0.0
    %230 = vmatpush1.msra.mxu0 0.0
    %231 = vmatprep.subr.mxu0 0.0
    %232 = vmatpush1.msra.mxu0 0.0
    %233 = vmatprep.subr.mxu0 0.0
    %234 = vmatpush1.msra.mxu0 0.0
    %235 = vmatprep.subr.mxu0 0.0
    %236 = vmatpush1.msra.mxu0 0.0
    %237 = vmatprep.subr.mxu0 0.0
    %238 = vmatpush1.msra.mxu0 0.0
    %239 = vmatprep.subr.mxu0 0.0
    %240 = vmatpush1.msra.mxu0 0.0
    %241 = vmatprep.subr.mxu0 0.0
    %242 = vmatpush1.msra.mxu0 0.0
    %243 = vmatprep.subr.mxu0 0.0
    %244 = vmatpush1.msra.mxu0 0.0
    %245 = vmatprep.subr.mxu0 0.0
    %246 = vmatpush1.msra.mxu0 0.0
    %247 = vmatprep.subr.mxu0 0.0
    %248 = vmatpush1.msra.mxu0 0.0
    %249 = vmatprep.subr.mxu0 0.0
    %250 = vmatpush1.msra.mxu0 0.0
    %251 = vmatprep.subr.mxu0 0.0
    %252 = vmatpush1.msra.mxu0 0.0
    %253 = vmatprep.subr.mxu0 0.0
    %254 = vmatpush1.msra.mxu0 0.0
    %255 = vmatprep.subr.mxu0 0.0
    %256 = vmatpush1.msra.mxu0 0.0
    %257 = vmatprep.subr.mxu0 0.0
    %258 = vmatpush1.msra.mxu0 0.0
    %259 = vmatprep.subr.mxu0 0.0
    %260 = vmatpush1.msra.mxu0 0.0
    %261 = vmatprep.subr.mxu0 0.0
    %262 = vmatpush1.msra.mxu0 0.0
    %263 = vmatprep.mubr.f32.mxu0 0.0
    %264 = vmatmul.mubr.f32.gmra.mrb[0].mxu0 %v197
    %v265 = vpop.f32.mrb[0].mxu0
    %v266 = vadd.f32 %v195, %v265
    %v267 = vpop.f32.mrb[0].mxu0
    %268 = vdwg.mxu0
    %v269 = vmax.f32 %v266, 0.0
    %v270 = vsel %vm76, %v269, 0.0
    %v271 = vrot.slane %v270, 4
    %v272 = vadd.f32 %v270, %v271
    %v273 = vrot.slane %v272, 2
    %v274 = vadd.f32 %v272, %v273
    %v275 = vrot.slane %v274, 1
    %v276 = vadd.f32 %v274, %v275
    %v277 = vmul.f32 %v276, %v158
    %v278 = vsub.f32 %v269, %v277
    %v279 = vmul.f32 %v278, %v278
    %v280 = vsel %vm76, %v279, 0.0
    %v281 = vrot.slane %v280, 4
    %v282 = vadd.f32 %v280, %v281
    %v283 = vrot.slane %v282, 2
    %v284 = vadd.f32 %v282, %v283
    %v285 = vrot.slane %v284, 1
    %v286 = vadd.f32 %v284, %v285
    %v287 = vmul.f32 %v286, %v158
    %v288 = vadd.f32 %v287, 1e-05
    %v289 = vrsqrt.pop %v288
    %v290 = vmul.f32 %v66, %v289
    %v291 = vmul.f32 %v277, %v290
    %v293 = vrot.slane %v291, 7
    %v295 = vsub.f32 %v66, %v293
    %v296 = vlaneseq
    %v297 = vshrl.u32 %v296, 7
    %v298 = vsub.s32 4, %v297
    %v299 = vrot.slane %v290, %v298
    %v300 = vmul.f32 %v269, %v299
    %v301 = vlaneseq
    %v302 = vshrl.u32 %v301, 7
    %v303 = vsub.s32 5, %v302
    %v304 = vrot.slane %v295, %v303
    %v305 = vadd.f32 %v300, %v304
    %v306 = vld [vmem:[#allocation5] sm:$0xff]
    %v307 = vld [vmem:[#allocation5 + $0x8] sm:$0xff]
    %v308 = vld [vmem:[#allocation5 + $0x10] sm:$0xff]
    %v309 = vld [vmem:[#allocation5 + $0x18] sm:$0xff]
    %v310 = vlaneseq
    %v311 = vshrl.u32 %v310, 7
    %v312 = vsub.s32 6, %v311
    %v313 = vrot.slane %v66, %v312
    %v315 = vsel %vm76, %v305, 0
    %317 = vmatprep.subr.mxu0 0.0
    %318 = vmatpush1.msra.mxu0 %v306
    %319 = vmatprep.subr.mxu0 0.0
    %320 = vmatpush1.msra.mxu0 %v307
    %321 = vmatprep.subr.mxu0 0.0
    %322 = vmatpush1.msra.mxu0 %v308
    %323 = vmatprep.subr.mxu0 0.0
    %324 = vmatpush1.msra.mxu0 %v309
    %325 = vmatprep.subr.mxu0 0.0
    %326 = vmatpush1.msra.mxu0 0.0
    %327 = vmatprep.subr.mxu0 0.0
    %328 = vmatpush1.msra.mxu0 0.0
    %329 = vmatprep.subr.mxu0 0.0
    %330 = vmatpush1.msra.mxu0 0.0
    %331 = vmatprep.subr.mxu0 0.0
    %332 = vmatpush1.msra.mxu0 0.0
    %333 = vmatprep.subr.mxu0 0.0
    %334 = vmatpush1.msra.mxu0 0.0
    %335 = vmatprep.subr.mxu0 0.0
    %336 = vmatpush1.msra.mxu0 0.0
    %337 = vmatprep.subr.mxu0 0.0
    %338 = vmatpush1.msra.mxu0 0.0
    %339 = vmatprep.subr.mxu0 0.0
    %340 = vmatpush1.msra.mxu0 0.0
    %341 = vmatprep.subr.mxu0 0.0
    %342 = vmatpush1.msra.mxu0 0.0
    %343 = vmatprep.subr.mxu0 0.0
    %344 = vmatpush1.msra.mxu0 0.0
    %345 = vmatprep.subr.mxu0 0.0
    %346 = vmatpush1.msra.mxu0 0.0
    %347 = vmatprep.subr.mxu0 0.0
    %348 = vmatpush1.msra.mxu0 0.0
    %349 = vmatprep.subr.mxu0 0.0
    %350 = vmatpush1.msra.mxu0 0.0
    %351 = vmatprep.subr.mxu0 0.0
    %352 = vmatpush1.msra.mxu0 0.0
    %353 = vmatprep.subr.mxu0 0.0
    %354 = vmatpush1.msra.mxu0 0.0
    %355 = vmatprep.subr.mxu0 0.0
    %356 = vmatpush1.msra.mxu0 0.0
    %357 = vmatprep.subr.mxu0 0.0
    %358 = vmatpush1.msra.mxu0 0.0
    %359 = vmatprep.subr.mxu0 0.0
    %360 = vmatpush1.msra.mxu0 0.0
    %361 = vmatprep.subr.mxu0 0.0
    %362 = vmatpush1.msra.mxu0 0.0
    %363 = vmatprep.subr.mxu0 0.0
    %364 = vmatpush1.msra.mxu0 0.0
    %365 = vmatprep.subr.mxu0 0.0
    %366 = vmatpush1.msra.mxu0 0.0
    %367 = vmatprep.subr.mxu0 0.0
    %368 = vmatpush1.msra.mxu0 0.0
    %369 = vmatprep.subr.mxu0 0.0
    %370 = vmatpush1.msra.mxu0 0.0
    %371 = vmatprep.subr.mxu0 0.0
    %372 = vmatpush1.msra.mxu0 0.0
    %373 = vmatprep.subr.mxu0 0.0
    %374 = vmatpush1.msra.mxu0 0.0
    %375 = vmatprep.subr.mxu0 0.0
    %376 = vmatpush1.msra.mxu0 0.0
    %377 = vmatprep.subr.mxu0 0.0
    %378 = vmatpush1.msra.mxu0 0.0
    %379 = vmatprep.subr.mxu0 0.0
    %380 = vmatpush1.msra.mxu0 0.0
    %381 = vmatprep.mubr.f32.mxu0 0.0
    %382 = vmatmul.mubr.f32.gmra.mrb[0].mxu0 %v315
    %v383 = vpop.f32.mrb[0].mxu0
    %v384 = vadd.f32 %v313, %v383
    %v385 = vpop.f32.mrb[0].mxu0
    %386 = vdwg.mxu0
    %v387 = vmax.f32 %v384, 0.0
    %v388 = vsel %vm76, %v387, 0.0
    %v389 = vrot.slane %v388, 4
    %v390 = vadd.f32 %v388, %v389
    %v391 = vrot.slane %v390, 2
    %v392 = vadd.f32 %v390, %v391
    %v393 = vrot.slane %v392, 1
    %v394 = vadd.f32 %v392, %v393
    %v395 = vmul.f32 %v394, %v158
    %v396 = vsub.f32 %v387, %v395
    %v397 = vmul.f32 %v396, %v396
    %v398 = vsel %vm76, %v397, 0.0
    %v399 = vrot.slane %v398, 4
    %v400 = vadd.f32 %v398, %v399
    %v401 = vrot.slane %v400, 2
    %v402 = vadd.f32 %v400, %v401
    %v403 = vrot.slane %v402, 1
    %v404 = vadd.f32 %v402, %v403
    %v405 = vmul.f32 %v404, %v158
    %v406 = vadd.f32 %v405, 1e-05
    %v407 = vrsqrt.pop %v406
    %v408 = vmul.f32 %v66, %v407
    %v409 = vmul.f32 %v395, %v408
    %v411 = vrot.slane %v409, 7
    %v413 = vsub.f32 %v67, %v411
    %v414 = vlaneseq
    %v415 = vshrl.u32 %v414, 7
    %v416 = vsub.s32 7, %v415
    %v417 = vrot.slane %v408, %v416
    %v418 = vmul.f32 %v387, %v417
    %v419 = vlaneseq
    %v420 = vshrl.u32 %v419, 7
    %v421 = vsub.s32 0, %v420
    %v422 = vrot.slane %v413, %v421
    %v423 = vadd.f32 %v418, %v422
    %v424 = vld [vmem:[%s4] sm:$0xff]
    %v425 = vld [vmem:[%s4 + $0x8] sm:$0xff]
    %v426 = vld [vmem:[%s4 + $0x10] sm:$0xff]
    %v427 = vld [vmem:[%s4 + $0x18] sm:$0xff]
    %v429 = vsel %vm76, %v423, 0
    %431 = vmatprep.subr.mxu0 0.0
    %432 = vmatpush1.msra.mxu0 %v424
    %433 = vmatprep.subr.mxu0 0.0
    %434 = vmatpush1.msra.mxu0 %v425
    %435 = vmatprep.subr.mxu0 0.0
    %436 = vmatpush1.msra.mxu0 %v426
    %437 = vmatprep.subr.mxu0 0.0
    %438 = vmatpush1.msra.mxu0 %v427
    %439 = vmatprep.subr.mxu0 0.0
    %440 = vmatpush1.msra.mxu0 0.0
    %441 = vmatprep.subr.mxu0 0.0
    %442 = vmatpush1.msra.mxu0 0.0
    %443 = vmatprep.subr.mxu0 0.0
    %444 = vmatpush1.msra.mxu0 0.0
    %445 = vmatprep.subr.mxu0 0.0
    %446 = vmatpush1.msra.mxu0 0.0
    %447 = vmatprep.subr.mxu0 0.0
    %448 = vmatpush1.msra.mxu0 0.0
    %449 = vmatprep.subr.mxu0 0.0
    %450 = vmatpush1.msra.mxu0 0.0
    %451 = vmatprep.subr.mxu0 0.0
    %452 = vmatpush1.msra.mxu0 0.0
    %453 = vmatprep.subr.mxu0 0.0
    %454 = vmatpush1.msra.mxu0 0.0
    %455 = vmatprep.subr.mxu0 0.0
    %456 = vmatpush1.msra.mxu0 0.0
    %457 = vmatprep.subr.mxu0 0.0
    %458 = vmatpush1.msra.mxu0 0.0
    %459 = vmatprep.subr.mxu0 0.0
    %460 = vmatpush1.msra.mxu0 0.0
    %461 = vmatprep.subr.mxu0 0.0
    %462 = vmatpush1.msra.mxu0 0.0
    %463 = vmatprep.subr.mxu0 0.0
    %464 = vmatpush1.msra.mxu0 0.0
    %465 = vmatprep.subr.mxu0 0.0
    %466 = vmatpush1.msra.mxu0 0.0
    %467 = vmatprep.subr.mxu0 0.0
    %468 = vmatpush1.msra.mxu0 0.0
    %469 = vmatprep.subr.mxu0 0.0
    %470 = vmatpush1.msra.mxu0 0.0
    %471 = vmatprep.subr.mxu0 0.0
    %472 = vmatpush1.msra.mxu0 0.0
    %473 = vmatprep.subr.mxu0 0.0
    %474 = vmatpush1.msra.mxu0 0.0
    %475 = vmatprep.subr.mxu0 0.0
    %476 = vmatpush1.msra.mxu0 0.0
    %477 = vmatprep.subr.mxu0 0.0
    %478 = vmatpush1.msra.mxu0 0.0
    %479 = vmatprep.subr.mxu0 0.0
    %480 = vmatpush1.msra.mxu0 0.0
    %481 = vmatprep.subr.mxu0 0.0
    %482 = vmatpush1.msra.mxu0 0.0
    %483 = vmatprep.subr.mxu0 0.0
    %484 = vmatpush1.msra.mxu0 0.0
    %485 = vmatprep.subr.mxu0 0.0
    %486 = vmatpush1.msra.mxu0 0.0
    %487 = vmatprep.subr.mxu0 0.0
    %488 = vmatpush1.msra.mxu0 0.0
    %489 = vmatprep.subr.mxu0 0.0
    %490 = vmatpush1.msra.mxu0 0.0
    %491 = vmatprep.subr.mxu0 0.0
    %492 = vmatpush1.msra.mxu0 0.0
    %493 = vmatprep.subr.mxu0 0.0
    %494 = vmatpush1.msra.mxu0 0.0
    %495 = vmatprep.mubr.f32.mxu0 0.0
    %496 = vmatmul.mubr.f32.gmra.mrb[0].mxu0 %v429
    %v497 = vpop.f32.mrb[0].mxu0
    %v498 = vadd.f32 0.0, %v497
    %v499 = vpop.f32.mrb[0].mxu0
    %500 = vdwg.mxu0
    %vm501 = vcmask 64512
    %v502 = vsel %vm501, %v498, -inf
    %503 = vmax.xlane.f32.xlu0 %v502
    %v504 = vpop.xlane.xlu0 %503
    %v505 = vsub.f32 %v498, %v504
    %v506 = vmul.f32 %v505, 1.442695
    %v507 = vpow.pop %v506
    %v508 = vsel %vm501, %v507, 0.0
    %509 = vadd.xlane.f32.xlu0 %v508
    %v510 = vpop.xlane.xlu0 %509
    %v511 = vrcp.pop %v510
    %v512 = vmul.f32 %v507, %v511
    %513 = vst.msk [vmem:[#allocation8] sm:$0xff] %vm501, %v512
    // Predicated region
    $region38: #{mlp_classifier_forward.1} parent=1 // pred_check
      _
    $region39: #{mlp_classifier_forward.1} parent=1 // pred_check_branch
      %515 = sbr.rel (0) target = $region41
    $region40: #{mlp_classifier_forward.1} parent=1 // pred_region
      %s517 = ssub.s32 128, 128
      %518 = vsyncadd [#allocation4], %s517
      %s520 = sshll.u32 [#allocation8], 4
      %s521 = int_to_ptr.vmem [resolvable:$true] %s520
      %523 = dma.vmem_to_hbm [thread:$0]  %s521, 128, %s6, [#allocation4]
    $region41: #{mlp_classifier_forward.1} parent=1 // pred_fallthru
      _
    // Predicated region
    $region42: #{mlp_classifier_forward.1} parent=1 // pred_check
      _
    $region43: #{mlp_classifier_forward.1} parent=1 // pred_check_branch
      %525 = sbr.rel (0) target = $region45
    $region44: #{mlp_classifier_forward.1} parent=1 // pred_region
      %526 = dma.done [#allocation4], 128
    $region45: #{mlp_classifier_forward.1} parent=1 // pred_fallthru
      _
    %527 = vsyncpa [#allocation3], 1
    %528 = vsyncpa [#allocation6], 1
    %529 = vsyncpa [#allocation4], 1

</llo_original>
